<compile_context>
chip_gen: v7x
topology: tpu7x:2x2x1
jax: 0.10.0
libtpu: 0.0.40
codegen_flags: <defaults>
</compile_context>

<pallas_src>
import functools

import jax
import jax.numpy as jnp
from jax.experimental import pallas as pl
from jax.experimental.pallas import tpu as pltpu


_LANE = 128
_NEG = -1e30  # inert pad for softmax logits: exp underflows to exactly 0 (f32)


def _round_up(x, m):
    return (x + m - 1) // m * m


def actor_kernel(n_actions, x_ref, w1_ref, w23_ref, b_ref, o_ref):
    """Fused fc1+ReLU -> fc2+ReLU -> pi+softmax for one batch tile.

    x_ref   : (TB, D_in)       f32 state tile (cast to bf16 in-kernel)
    w1_ref  : (D_in, P)        compute dtype, fc1 weight (pre-transposed, 0-padded)
    w23_ref : (2, P, P)        compute dtype, [fc2, pi] weights (pre-transposed, 0-padded)
    b_ref   : (3, P)           f32 biases; pi-bias pad columns hold -1e30
    o_ref   : (TB, n_actions)  f32 probabilities (only real action columns stored)
    """
    cdt = w1_ref.dtype

    # In-kernel cast (free VPU work in a mem-bound regime; avoids a wrapper pass).
    x = x_ref[...].astype(cdt)

    # fc1 + ReLU  (MXU accumulates in f32; elementwise stays f32 on the VPU)
    h1 = jnp.dot(x, w1_ref[...], preferred_element_type=jnp.float32)
    h1 = jnp.maximum(h1 + b_ref[0:1, :], 0.0)

    # fc2 + ReLU
    h2 = jnp.dot(h1.astype(cdt), w23_ref[0], preferred_element_type=jnp.float32)
    h2 = jnp.maximum(h2 + b_ref[1:2, :], 0.0)

    # pi head + numerically-stable softmax over the last axis (PyTorch dim=1).
    logits = jnp.dot(h2.astype(cdt), w23_ref[1], preferred_element_type=jnp.float32)
    logits = logits + b_ref[2:3, :]
    m = jnp.max(logits, axis=-1, keepdims=True)
    e = jnp.exp(logits - m)                       # padded cols -> exactly 0
    denom = jnp.sum(e, axis=-1, keepdims=True)
    pi = e / denom                                # exact division: rows sum to 1

    # Store only the real action columns (narrow, masked store; 16x fewer bytes).
    o_ref[...] = pi[:, :n_actions].astype(o_ref.dtype)


def prepare_actor_params(w1, b1, w2, b2, w3, b3, *, compute_dtype=jnp.bfloat16):
    """Pack/pad the (already transposed, (in, out)) Linear params for the kernel.

    Pass compute_dtype=jnp.float32 if bit-closer parity with the f32 PyTorch
    module is required; elementwise math is f32 regardless.
    """
    b1 = jnp.reshape(b1, (-1,))
    b2 = jnp.reshape(b2, (-1,))
    b3 = jnp.reshape(b3, (-1,))
    input_dims, fc1 = w1.shape
    fc2 = w2.shape[1]
    n_actions = w3.shape[1]
    P = _round_up(max(fc1, fc2, n_actions), _LANE)

    def pad_sq(w):
        r, c = w.shape
        return jnp.pad(w, ((0, P - r), (0, P - c))).astype(compute_dtype)

    w1p = jnp.pad(w1, ((0, 0), (0, P - fc1))).astype(compute_dtype)   # (D_in, P)
    w23 = jnp.stack([pad_sq(w2), pad_sq(w3)], axis=0)                 # (2, P, P)
    b123 = jnp.stack(
        [
            jnp.pad(b1, (0, P - fc1)),
            jnp.pad(b2, (0, P - fc2)),
            jnp.pad(b3, (0, P - n_actions), constant_values=_NEG),
        ],
        axis=0,
    ).astype(jnp.float32)                                             # (3, P)

    return {"w1": w1p, "w23": w23, "b": b123, "n_actions": n_actions, "pad": P}


def actor_forward(state, params, *, block_b=1024):
    """softmax(relu(relu(state@W1+b1)@W2+b2)@W3+b3), batched over a 1-D grid."""
    w1p, w23, b123 = params["w1"], params["w23"], params["b"]
    n_actions, P = params["n_actions"], params["pad"]
    B, D_in = state.shape

    # Batch tile: multiple of 16 (bf16 packs 16 sublanes/vreg), capped by B.
    TB = min(_round_up(block_b, 16), _round_up(B, 16))
    # Keep >= 2 grid steps so v7x megacore shards the batch across both TCs.
    if pl.cdiv(B, TB) < 2 and B > 16:
        TB = _round_up(pl.cdiv(B, 2), 16)
    grid = (pl.cdiv(B, TB),)   # edge block masked; no wrapper-side batch pad

    kernel = functools.partial(actor_kernel, n_actions)
    out = pl.pallas_call(
        kernel,
        out_shape=jax.ShapeDtypeStruct((B, n_actions), jnp.float32),
        grid=grid,
        in_specs=[
            pl.BlockSpec((TB, D_in), lambda i: (i, 0)),     # state: streamed per tile
            pl.BlockSpec((D_in, P), lambda i: (0, 0)),      # params: VMEM-resident
            pl.BlockSpec((2, P, P), lambda i: (0, 0, 0)),
            pl.BlockSpec((3, P), lambda i: (0, 0)),
        ],
        out_specs=pl.BlockSpec((TB, n_actions), lambda i: (i, 0)),
        compiler_params=pltpu.CompilerParams(
            dimension_semantics=("parallel",)),
    )(state, w1p, w23, b123)

    return out


def init_linear(key, fan_in, fan_out):
    # Mimic PyTorch nn.Linear default init: U(-1/sqrt(fan_in), 1/sqrt(fan_in)).
    kw, kb = jax.random.split(key)
    bound = 1.0 / jnp.sqrt(fan_in)
    # Stored already transposed: (fan_in, fan_out), so forward is x @ W + b.
    w = jax.random.uniform(kw, (fan_in, fan_out), jnp.float32, -bound, bound)
    b = jax.random.uniform(kb, (1, fan_out), jnp.float32, -bound, bound)
    return w, b


if __name__ == "__main__":
    # Small shapes consistent with the MLP: input_dims=16, fc1=64, fc2=64, n_actions=8.
    # batch=50 is not a tile multiple, so the default tiling exercises both the
    # >=2-grid-step split (TB=32 -> 2 "parallel" steps) and a masked edge block.
    batch, input_dims, fc1_dims, fc2_dims, n_actions = 50, 16, 64, 64, 8

    key = jax.random.PRNGKey(0)
    k_x, k1, k2, k3 = jax.random.split(key, 4)

    state = jax.random.normal(k_x, (batch, input_dims), jnp.float32)
    w1, b1 = init_linear(k1, input_dims, fc1_dims)
    w2, b2 = init_linear(k2, fc1_dims, fc2_dims)
    w3, b3 = init_linear(k3, fc2_dims, n_actions)

    params = prepare_actor_params(w1, b1, w2, b2, w3, b3)

    pi = actor_forward(state, params)
    pi = jax.block_until_ready(pi)

    # --- correctness checks ---
    assert pi.shape == (batch, n_actions)
    # Exact-division softmax: rows sum to 1 to f32 precision.
    assert jnp.allclose(jnp.sum(pi, axis=1), 1.0, atol=1e-4)

    # Apples-to-apples reference: same bf16 rounding of matmul operands.
    c = lambda a: a.astype(jnp.bfloat16).astype(jnp.float32)
    h1 = jnp.maximum(c(state) @ c(w1) + b1, 0.0)
    h2 = jnp.maximum(c(h1) @ c(w2) + b2, 0.0)
    ref_bf16 = jax.nn.softmax(c(h2) @ c(w3) + b3, axis=1)
    assert jnp.allclose(pi, ref_bf16, atol=2e-3)

    # Module-semantics (pure f32) reference: loose tol for bf16 operand rounding.
    h1f = jnp.maximum(state @ w1 + b1, 0.0)
    h2f = jnp.maximum(h1f @ w2 + b2, 0.0)
    ref_f32 = jax.nn.softmax(h2f @ w3 + b3, axis=1)
    assert jnp.allclose(pi, ref_f32, atol=5e-2)

    print("KERNEL_OK")
</pallas_src>

<mosaic_0001>
module attributes {stable_mosaic.version = 11 : i64} {
  func.func @actor_kernel(%arg0: i32, %arg1: memref<32x16xf32, #tpu.memory_space<vmem>>, %arg2: memref<16x128xbf16, #tpu.memory_space<vmem>>, %arg3: memref<2x128x128xbf16, #tpu.memory_space<vmem>>, %arg4: memref<3x128xf32, #tpu.memory_space<vmem>>, %arg5: memref<32x8xf32, #tpu.memory_space<vmem>>) attributes {dimension_semantics = [#tpu.dimension_semantics<parallel>], iteration_bounds = array<i64: 2>, scalar_prefetch = 0 : i64, scratch_operands = 0 : i64, tpu.core_type = #tpu.core_type<tc>, window_params = [{transform_indices = @transform_0, window_bounds = array<i64: 32, 16>}, {pipeline_mode = #tpu.pipeline_mode<synchronous>, transform_indices = @transform_1, window_bounds = array<i64: 16, 128>}, {pipeline_mode = #tpu.pipeline_mode<synchronous>, transform_indices = @transform_2, window_bounds = array<i64: 2, 128, 128>}, {pipeline_mode = #tpu.pipeline_mode<synchronous>, transform_indices = @transform_3, window_bounds = array<i64: 3, 128>}, {transform_indices = @transform_4, window_bounds = array<i64: 32, 8>}]} {
    %c0 = arith.constant 0 : index
    %c0_0 = arith.constant 0 : index
    %0 = vector.load %arg1[%c0, %c0_0] : memref<32x16xf32, #tpu.memory_space<vmem>>, vector<32x16xf32>
    %1 = arith.truncf %0 : vector<32x16xf32> to vector<32x16xbf16>
    %c0_1 = arith.constant 0 : index
    %c0_2 = arith.constant 0 : index
    %2 = vector.load %arg2[%c0_1, %c0_2] : memref<16x128xbf16, #tpu.memory_space<vmem>>, vector<16x128xbf16>
    %cst = arith.constant dense<0.000000e+00> : vector<32x128xf32>
    %3 = tpu.matmul %1, %2, %cst {dimension_numbers = #tpu.dot_dimension_numbers<[1], [0], [0], [1], [0, 0, 1, 1], [], []>} : vector<32x16xbf16>, vector<16x128xbf16>, vector<32x128xf32> -> vector<32x128xf32>
    %c0_3 = arith.constant 0 : index
    %c0_4 = arith.constant 0 : index
    %4 = vector.load %arg4[%c0_3, %c0_4] : memref<3x128xf32, #tpu.memory_space<vmem>>, vector<1x128xf32>
    %5 = vector.broadcast %4 : vector<1x128xf32> to vector<32x128xf32>
    %6 = arith.addf %3, %5 : vector<32x128xf32>
    %cst_5 = arith.constant 0.000000e+00 : f32
    %7 = vector.broadcast %cst_5 : f32 to vector<32x128xf32>
    %8 = arith.maximumf %6, %7 : vector<32x128xf32>
    %9 = arith.truncf %8 : vector<32x128xf32> to vector<32x128xbf16>
    %c0_6 = arith.constant 0 : index
    %c0_7 = arith.constant 0 : index
    %c0_8 = arith.constant 0 : index
    %10 = vector.load %arg3[%c0_6, %c0_7, %c0_8] : memref<2x128x128xbf16, #tpu.memory_space<vmem>>, vector<1x128x128xbf16>
    %11 = vector.shape_cast %10 : vector<1x128x128xbf16> to vector<128x128xbf16>
    %cst_9 = arith.constant dense<0.000000e+00> : vector<32x128xf32>
    %12 = tpu.matmul %9, %11, %cst_9 {dimension_numbers = #tpu.dot_dimension_numbers<[1], [0], [0], [1], [0, 0, 1, 1], [], []>} : vector<32x128xbf16>, vector<128x128xbf16>, vector<32x128xf32> -> vector<32x128xf32>
    %c1 = arith.constant 1 : index
    %c0_10 = arith.constant 0 : index
    %13 = vector.load %arg4[%c1, %c0_10] : memref<3x128xf32, #tpu.memory_space<vmem>>, vector<1x128xf32>
    %14 = vector.broadcast %13 : vector<1x128xf32> to vector<32x128xf32>
    %15 = arith.addf %12, %14 : vector<32x128xf32>
    %cst_11 = arith.constant 0.000000e+00 : f32
    %16 = vector.broadcast %cst_11 : f32 to vector<32x128xf32>
    %17 = arith.maximumf %15, %16 : vector<32x128xf32>
    %18 = arith.truncf %17 : vector<32x128xf32> to vector<32x128xbf16>
    %c1_12 = arith.constant 1 : index
    %c0_13 = arith.constant 0 : index
    %c0_14 = arith.constant 0 : index
    %19 = vector.load %arg3[%c1_12, %c0_13, %c0_14] : memref<2x128x128xbf16, #tpu.memory_space<vmem>>, vector<1x128x128xbf16>
    %20 = vector.shape_cast %19 : vector<1x128x128xbf16> to vector<128x128xbf16>
    %cst_15 = arith.constant dense<0.000000e+00> : vector<32x128xf32>
    %21 = tpu.matmul %18, %20, %cst_15 {dimension_numbers = #tpu.dot_dimension_numbers<[1], [0], [0], [1], [0, 0, 1, 1], [], []>} : vector<32x128xbf16>, vector<128x128xbf16>, vector<32x128xf32> -> vector<32x128xf32>
    %c2 = arith.constant 2 : index
    %c0_16 = arith.constant 0 : index
    %22 = vector.load %arg4[%c2, %c0_16] : memref<3x128xf32, #tpu.memory_space<vmem>>, vector<1x128xf32>
    %23 = vector.broadcast %22 : vector<1x128xf32> to vector<32x128xf32>
    %24 = arith.addf %21, %23 : vector<32x128xf32>
    %cst_17 = arith.constant dense<0xFF800000> : vector<32xf32>
    %25 = vector.multi_reduction <maximumf>, %24, %cst_17 [1] : vector<32x128xf32> to vector<32xf32>
    %26 = vector.shape_cast %25 : vector<32xf32> to vector<32x1xf32>
    %27 = vector.broadcast %26 : vector<32x1xf32> to vector<32x128xf32>
    %28 = arith.subf %24, %27 : vector<32x128xf32>
    %29 = math.exp %28 : vector<32x128xf32>
    %cst_18 = arith.constant dense<0.000000e+00> : vector<32xf32>
    %30 = vector.multi_reduction <add>, %29, %cst_18 [1] : vector<32x128xf32> to vector<32xf32>
    %31 = vector.shape_cast %30 : vector<32xf32> to vector<32x1xf32>
    %32 = vector.broadcast %31 : vector<32x1xf32> to vector<32x128xf32>
    %33 = arith.divf %29, %32 : vector<32x128xf32>
    %34 = vector.extract_strided_slice %33 {offsets = [0, 0], sizes = [32, 8], strides = [1, 1]} : vector<32x128xf32> to vector<32x8xf32>
    %c0_19 = arith.constant 0 : index
    %c0_20 = arith.constant 0 : index
    %35 = vector.load %arg5[%c0_19, %c0_20] : memref<32x8xf32, #tpu.memory_space<vmem>>, vector<32x8xf32>
    tpu.vector_store %arg5[%c0_19, %c0_20], %34 {strides = array<i32>} : memref<32x8xf32, #tpu.memory_space<vmem>>, vector<32x8xf32>,
    return
  }
  func.func @transform_0(%arg0: i32) -> (i32, i32) {
    %c0_i32 = arith.constant 0 : i32
    %c0_i32_0 = arith.constant 0 : i32
    return %arg0, %c0_i32 : i32, i32
  }
  func.func @transform_1(%arg0: i32) -> (i32, i32) {
    %c0_i32 = arith.constant 0 : i32
    %c0_i32_0 = arith.constant 0 : i32
    %c0_i32_1 = arith.constant 0 : i32
    return %c0_i32, %c0_i32_0 : i32, i32
  }
  func.func @transform_2(%arg0: i32) -> (i32, i32, i32) {
    %c0_i32 = arith.constant 0 : i32
    %c0_i32_0 = arith.constant 0 : i32
    %c0_i32_1 = arith.constant 0 : i32
    %c0_i32_2 = arith.constant 0 : i32
    return %c0_i32, %c0_i32_0, %c0_i32_1 : i32, i32, i32
  }
  func.func @transform_3(%arg0: i32) -> (i32, i32) {
    %c0_i32 = arith.constant 0 : i32
    %c0_i32_0 = arith.constant 0 : i32
    %c0_i32_1 = arith.constant 0 : i32
    return %c0_i32, %c0_i32_0 : i32, i32
  }
  func.func @transform_4(%arg0: i32) -> (i32, i32) {
    %c0_i32 = arith.constant 0 : i32
    %c0_i32_0 = arith.constant 0 : i32
    return %arg0, %c0_i32 : i32, i32
  }
}

</mosaic_0001>

<llo_original>
// kernel: tpu_custom_call.1
$region0: #{tpu_custom_call.1}
  #allocation0 [shape = 'u32[]', space=smem, size = 0x4, offset = 0x4, fixed_abs, tag = 'smem constant byte address 0x4 - core index']
  #allocation1 [shape = 'u32[144,128]{1,0:T(1,128)}', space=vmem, size = 0x12000, scoped, tag = 'internal scratch']
  %s0 = inlined_call_operand.vmem [shape: f32[50,16], index: 0, kind: input, shape index: {}]
  %s1 = inlined_call_operand.vmem [shape: bf16[16,128], index: 1, kind: input, shape index: {}]
  %s2 = inlined_call_operand.hbm [shape: bf16[2,128,128], index: 2, kind: input, shape index: {}]
  %s3 = inlined_call_operand.vmem [shape: f32[3,128], index: 3, kind: input, shape index: {}]
  %s4 = inlined_call_operand.vmem [shape: f32[50,8], index: 4, kind: output, shape index: {}]
  %s5 = sld [smem:[#allocation0]]
  $region101: #{tpu_custom_call.1} parent=0
    _
  %s7 = ssub.s32 1, %s5
  %s8 = scalar_select 0, %s7, %s5
  $region1: #{tpu_custom_call.1} parent=0
    #allocation2 [shape = 'u8[65536]{0}', space=vmem, size = 0x10000, scoped, tag = 'input window, operand 2, single buffered']
    #allocation3 [shape = 's32[2]{0}', space=sflag, size = 0x8, scoped, tag = 'scoped memory for tpu_custom_call.1']
    #allocation4 [shape = 'u8[32768]{0}', space=vmem, size = 0x8000, scoped, tag = 'output window, operand 0']
    %9 = vsyncpa [#allocation3], 0
    loop: start=0, step=1, limit=4
    $region2: #{tpu_custom_call.1} parent=1 // loop_pre_header
      _
    $region3: #{tpu_custom_call.1} parent=1 // loop_header
      %s11 = sphi 0, %s15
      %p12 = scmp.ge.s32.totalorder %s11, 4
      %s21 = sphi 0, %s23
      %s24 = sphi 0, %s21
      %s25 = sphi 0, %s24
      %s41 = sphi 0, %s25
      %s45 = sphi 0, %s45
      %s47 = sphi 0, %s45
      %s48 = sphi 0, %s47
      %s62 = sphi 0, %s48
      %s66 = sphi 0, %s66
      %s68 = sphi 0, %s66
      %s69 = sphi 0, %s68
      %s83 = sphi 0, %s69
      %s87 = sphi 0, %s87
      %s89 = sphi 0, %s87
      %s90 = sphi 0, %s89
      %s104 = sphi 0, %s90
      %s110 = sphi 0, %s112
      %s113 = sphi 0, %s110
      %s114 = sphi 0, %s113
      %s130 = sphi 0, %s114
    $region4: #{tpu_custom_call.1} parent=1 // loop_header_branch
      %14 = sbr.rel (%p12) target = $region8
    $region5: #{tpu_custom_call.1} parent=1 // loop_body
      %s16 = ssub.s32 %s11, 1
      %s17 = ssub.s32 %s11, 2
      %s18 = sadd.s32 %s11, 1
      %s19 = ssub.s32 %s11, %s18
      %p20 = scmp.eq.s32.totalorder %s19, 0
      %s22 = sadd.s32 %s21, 1
      %s23 = scalar_select %p20, %s21, %s22
      %p26 = pneg %p20
      %p27 = scmp.eq.s32.totalorder %s11, 1
      %p28 = por %p26, %p27
      %p29 = scmp.ne.s32.totalorder %s21, %s24
      %p30 = scmp.eq.s32.totalorder %s11, 0
      %p31 = por %p29, %p30
      %p32 = scmp.ne.s32.totalorder %s21, %s24
      %p33 = scmp.eq.s32.totalorder %s16, 1
      %p34 = por %p32, %p33
      %p35 = scmp.ne.s32.totalorder %s24, %s25
      %p36 = scmp.eq.s32.totalorder %s16, 0
      %p37 = por %p35, %p36
      %p38 = scmp.ne.s32.totalorder %s24, %s25
      %p39 = scmp.eq.s32.totalorder %s17, 1
      %p40 = por %p38, %p39
      %p42 = scmp.ne.s32.totalorder %s25, %s41
      %p43 = scmp.eq.s32.totalorder %s17, 0
      %p44 = por %p42, %p43
      %s46 = sadd.s32 %s45, 1
      %p49 = scmp.eq.s32.totalorder %s11, 1
      %p50 = scmp.ne.s32.totalorder %s45, %s47
      %p51 = scmp.eq.s32.totalorder %s11, 0
      %p52 = por %p50, %p51
      %p53 = scmp.ne.s32.totalorder %s45, %s47
      %p54 = scmp.eq.s32.totalorder %s16, 1
      %p55 = por %p53, %p54
      %p56 = scmp.ne.s32.totalorder %s47, %s48
      %p57 = scmp.eq.s32.totalorder %s16, 0
      %p58 = por %p56, %p57
      %p59 = scmp.ne.s32.totalorder %s47, %s48
      %p60 = scmp.eq.s32.totalorder %s17, 1
      %p61 = por %p59, %p60
      %p63 = scmp.ne.s32.totalorder %s48, %s62
      %p64 = scmp.eq.s32.totalorder %s17, 0
      %p65 = por %p63, %p64
      %s67 = sadd.s32 %s66, 1
      %p70 = scmp.eq.s32.totalorder %s11, 1
      %p71 = scmp.ne.s32.totalorder %s66, %s68
      %p72 = scmp.eq.s32.totalorder %s11, 0
      %p73 = por %p71, %p72
      %p74 = scmp.ne.s32.totalorder %s66, %s68
      %p75 = scmp.eq.s32.totalorder %s16, 1
      %p76 = por %p74, %p75
      %p77 = scmp.ne.s32.totalorder %s68, %s69
      %p78 = scmp.eq.s32.totalorder %s16, 0
      %p79 = por %p77, %p78
      %p80 = scmp.ne.s32.totalorder %s68, %s69
      %p81 = scmp.eq.s32.totalorder %s17, 1
      %p82 = por %p80, %p81
      %p84 = scmp.ne.s32.totalorder %s69, %s83
      %p85 = scmp.eq.s32.totalorder %s17, 0
      %p86 = por %p84, %p85
      %s88 = sadd.s32 %s87, 1
      %p91 = scmp.eq.s32.totalorder %s11, 1
      %p92 = scmp.ne.s32.totalorder %s87, %s89
      %p93 = scmp.eq.s32.totalorder %s11, 0
      %p94 = por %p92, %p93
      %p95 = scmp.ne.s32.totalorder %s87, %s89
      %p96 = scmp.eq.s32.totalorder %s16, 1
      %p97 = por %p95, %p96
      %p98 = scmp.ne.s32.totalorder %s89, %s90
      %p99 = scmp.eq.s32.totalorder %s16, 0
      %p100 = por %p98, %p99
      %p101 = scmp.ne.s32.totalorder %s89, %s90
      %p102 = scmp.eq.s32.totalorder %s17, 1
      %p103 = por %p101, %p102
      %p105 = scmp.ne.s32.totalorder %s90, %s104
      %p106 = scmp.eq.s32.totalorder %s17, 0
      %p107 = por %p105, %p106
      %s108 = ssub.s32 %s11, %s18
      %p109 = scmp.eq.s32.totalorder %s108, 0
      %s111 = sadd.s32 %s110, 1
      %s112 = scalar_select %p109, %s110, %s111
      %p115 = pneg %p109
      %p116 = scmp.eq.s32.totalorder %s11, 1
      %p117 = por %p115, %p116
      %p118 = scmp.ne.s32.totalorder %s110, %s113
      %p119 = scmp.eq.s32.totalorder %s11, 0
      %p120 = por %p118, %p119
      %p121 = scmp.ne.s32.totalorder %s110, %s113
      %p122 = scmp.eq.s32.totalorder %s16, 1
      %p123 = por %p121, %p122
      %p124 = scmp.ne.s32.totalorder %s113, %s114
      %p125 = scmp.eq.s32.totalorder %s16, 0
      %p126 = por %p124, %p125
      %p127 = scmp.ne.s32.totalorder %s113, %s114
      %p128 = scmp.eq.s32.totalorder %s17, 1
      %p129 = por %p127, %p128
      %p131 = scmp.ne.s32.totalorder %s114, %s130
      %p132 = scmp.eq.s32.totalorder %s17, 0
      %p133 = por %p131, %p132
      %p134 = scmp.le.s32.totalorder 1, %s11
      %p135 = scmp.lt.s32.totalorder %s11, 3
      %p136 = pnand %p134, %p135
      %p137 = pneg %p136
      // Predicated region
      $region9: #{tpu_custom_call.1} parent=5 // pred_check
        _
      $region10: #{tpu_custom_call.1} parent=5 // pred_check_branch
        %139 = sbr.rel (%p136) target = $region12
      $region11: #{tpu_custom_call.1} parent=5 // pred_region
        %s140 = ssub.s32 %s11, 1
        // Predicated region
        $region13: #{tpu_custom_call.1} parent=11 // pred_check
          %p141 = pneg %p58
        $region14: #{tpu_custom_call.1} parent=11 // pred_check_branch
          %143 = sbr.rel (%p141) target = $region16
        $region15: #{tpu_custom_call.1} parent=11 // pred_region
          _
        $region16: #{tpu_custom_call.1} parent=11 // pred_fallthru
          _
        // Predicated region
        $region17: #{tpu_custom_call.1} parent=11 // pred_check
          %p144 = pneg %p79
        $region18: #{tpu_custom_call.1} parent=11 // pred_check_branch
          %146 = sbr.rel (%p144) target = $region20
        $region19: #{tpu_custom_call.1} parent=11 // pred_region
          %s148 = ssub.s32 2048, 2048
          %149 = vsyncadd [#allocation3], %s148
          %s150 = sshll.u32 [#allocation2], 4
          %s151 = int_to_ptr.vmem [resolvable:$true] %s150
          %156 = dma.hbm_to_vmem [thread:$0]  %s2, 2048, %s151, [#allocation3], 64, 64, 4
        $region20: #{tpu_custom_call.1} parent=11 // pred_fallthru
          _
        // Predicated region
        $region21: #{tpu_custom_call.1} parent=11 // pred_check
          %p157 = pneg %p100
        $region22: #{tpu_custom_call.1} parent=11 // pred_check_branch
          %159 = sbr.rel (%p157) target = $region24
        $region23: #{tpu_custom_call.1} parent=11 // pred_region
          _
        $region24: #{tpu_custom_call.1} parent=11 // pred_fallthru
          _
      $region12: #{tpu_custom_call.1} parent=5 // pred_fallthru
        _
      %p160 = scmp.lt.s32.totalorder %s11, 2
      // Predicated region
      $region25: #{tpu_custom_call.1} parent=5 // pred_check
        %p161 = pneg %p160
      $region26: #{tpu_custom_call.1} parent=5 // pred_check_branch
        %163 = sbr.rel (%p161) target = $region28
      $region27: #{tpu_custom_call.1} parent=5 // pred_region
        // Predicated region
        $region29: #{tpu_custom_call.1} parent=27 // pred_check
          %p164 = pneg %p31
        $region30: #{tpu_custom_call.1} parent=27 // pred_check_branch
          %166 = sbr.rel (%p164) target = $region32
        $region31: #{tpu_custom_call.1} parent=27 // pred_region
          %s167 = smul.u32 4, %s11
          %s168 = ssub.s32 7, %s167
          %p169 = scmp.lt.s32.totalorder %s168, 4
          %s170 = scalar_select %p169, %s168, 4
          %s171 = smul.u32 128, %s170
          %p172 = scmp.lt.s32.totalorder %s167, 6
          %s173 = scalar_select %p172, %s167, 6
          %s174 = smul.addr %s173, 8
          %s175 = scalar_lea.vmem %s0, %s174
          %s176 = smul.u32 4, %s11
          %s177 = ssub.s32 7, %s176
          %p178 = scmp.lt.s32.totalorder %s177, 4
          %s179 = scalar_select %p178, %s177, 4
          %s180 = smul.u32 128, %s179
        $region32: #{tpu_custom_call.1} parent=27 // pred_fallthru
          _
      $region28: #{tpu_custom_call.1} parent=5 // pred_fallthru
        _
      %p181 = scmp.le.s32.totalorder 1, %s11
      %p182 = scmp.lt.s32.totalorder %s11, 3
      %p183 = pnand %p181, %p182
      %p184 = pneg %p183
      // Predicated region
      $region33: #{tpu_custom_call.1} parent=5 // pred_check
        _
      $region34: #{tpu_custom_call.1} parent=5 // pred_check_branch
        %186 = sbr.rel (%p183) target = $region36
      $region35: #{tpu_custom_call.1} parent=5 // pred_region
        %s187 = ssub.s32 %s11, 1
        // Predicated region
        $region37: #{tpu_custom_call.1} parent=35 // pred_check
          %p188 = pneg %p79
        $region38: #{tpu_custom_call.1} parent=35 // pred_check_branch
          %190 = sbr.rel (%p188) target = $region40
        $region39: #{tpu_custom_call.1} parent=35 // pred_region
          %191 = dma.done [#allocation3], 2048
        $region40: #{tpu_custom_call.1} parent=35 // pred_fallthru
          _
        %s192 = smul.u32 4, %s16
        %s193 = ssub.s32 7, %s192
        %p194 = scmp.lt.s32.totalorder %s193, 4
        %s195 = scalar_select %p194, %s193, 4
        %s196 = smul.u32 128, %s195
        %p197 = scmp.lt.s32.totalorder %s192, 6
        %s198 = scalar_select %p197, %s192, 6
        %s199 = smul.addr %s198, 8
        %s200 = scalar_lea.vmem %s0, %s199
        %p201 = pneg %p37
        %p202 = pneg %p34
        %p203 = pneg %p58
        %p204 = pneg %p55
        %p205 = pneg %p79
        %p206 = pneg %p76
        %p207 = pneg %p100
        %p208 = pneg %p97
        %p209 = pneg %p126
        %p210 = pneg %p123
        %s211 = sand.u32 %s113, 1
        %s212 = sand.u32 %s113, 1
        %s213 = smul.addr %s212, 32
        %s214 = scalar_lea.vmem [#allocation4], %s213
        %s215 = smul.u32 4, %s16
        %s216 = ssub.s32 7, %s215
        %p217 = scmp.lt.s32.totalorder %s216, 4
        %s218 = scalar_select %p217, %s216, 4
        %s219 = smul.u32 128, %s218
        %p220 = scmp.lt.s32.totalorder %s215, 6
        %s221 = scalar_select %p220, %s215, 6
        %s222 = smul.addr %s221, 8
        %s223 = scalar_lea.vmem %s0, %s222
        %s224 = smul.u32 4, %s16
        %s225 = ssub.s32 7, %s224
        %p226 = scmp.lt.s32.totalorder %s225, 4
        %s227 = scalar_select %p226, %s225, 4
        %s228 = smul.u32 128, %s227
        %s229 = smul.u32 4, %s16
        %s230 = ssub.s32 7, %s229
        %p231 = scmp.lt.s32.totalorder %s230, 4
        %s232 = scalar_select %p231, %s230, 4
        %s233 = smul.u32 128, %s232
        %v235 = vld [vmem:[%s223] sm:$0xff]
        %v236 = vld [vmem:[%s223 + $0x8] sm:$0xff]
        %v237 = vld [vmem:[%s223 + $0x10] sm:$0xff]
        %v238 = vld [vmem:[%s223 + $0x18] sm:$0xff]
        %v239 = vpack.c.bf16 %v236, %v235
        %v240 = vpack.c.bf16 %v238, %v237
        %v241 = vld [vmem:[%s1] sm:$0xf]
        %v242 = vld [vmem:[%s1 + $0x4] sm:$0xf]
        %v243 = vld [vmem:[%s3] sm:$0x1]
        %v244 = vlaneseq
        %v245 = vshrl.u32 %v244, 7
        %v246 = vsub.s32 0, %v245
        %v247 = vrot.slane %v243, %v246
        %v250 = vunpack.c.l.b16 %v241
        %v251 = vunpack.c.l.b16 %v242
        %v252 = vpack.c.b16 %v251, %v250
        %vm254 = vcmask 130048
        %v256 = vsel %vm254, %v239, 0
        %v259 = vsel %vm254, %v240, 0
        %261 = vmatprep.subr.bf16.mxu0 0
        %262 = vmatpush1.bf16.msra.mxu0 %v252
        %263 = vmatprep.subr.bf16.mxu0 0
        %264 = vmatpush1.bf16.msra.mxu0 0
        %265 = vmatprep.subr.bf16.mxu0 0
        %266 = vmatpush1.bf16.msra.mxu0 0
        %267 = vmatprep.subr.bf16.mxu0 0
        %268 = vmatpush1.bf16.msra.mxu0 0
        %269 = vmatprep.subr.bf16.mxu0 0
        %270 = vmatpush1.bf16.msra.mxu0 0
        %271 = vmatprep.subr.bf16.mxu0 0
        %272 = vmatpush1.bf16.msra.mxu0 0
        %273 = vmatprep.subr.bf16.mxu0 0
        %274 = vmatpush1.bf16.msra.mxu0 0
        %275 = vmatprep.subr.bf16.mxu0 0
        %276 = vmatpush1.bf16.msra.mxu0 0
        %277 = vmatprep.subr.bf16.mxu0 0
        %278 = vmatpush1.bf16.msra.mxu0 0
        %279 = vmatprep.subr.bf16.mxu0 0
        %280 = vmatpush1.bf16.msra.mxu0 0
        %281 = vmatprep.subr.bf16.mxu0 0
        %282 = vmatpush1.bf16.msra.mxu0 0
        %283 = vmatprep.subr.bf16.mxu0 0
        %284 = vmatpush1.bf16.msra.mxu0 0
        %285 = vmatprep.subr.bf16.mxu0 0
        %286 = vmatpush1.bf16.msra.mxu0 0
        %287 = vmatprep.subr.bf16.mxu0 0
        %288 = vmatpush1.bf16.msra.mxu0 0
        %289 = vmatprep.subr.bf16.mxu0 0
        %290 = vmatpush1.bf16.msra.mxu0 0
        %291 = vmatprep.subr.bf16.mxu0 0
        %292 = vmatpush1.bf16.msra.mxu0 0
        %293 = vmatprep.mubr.bf16.mxu0 0
        %294 = vmatmul.mubr.bf16.gmra.mrb[0].mxu0 %v256
        %v295 = vpop.f32.mrb[0].mxu0
        %v296 = vadd.f32 %v247, %v295
        %v297 = vpop.f32.mrb[0].mxu0
        %v298 = vpop.f32.mrb[0].mxu0
        %v299 = vadd.f32 %v247, %v298
        %v300 = vpop.f32.mrb[0].mxu0
        %301 = vmatprep.mubr.bf16.mxu0 0
        %302 = vmatmul.mubr.bf16.gmra.mrb[0].mxu0 %v259
        %v303 = vpop.f32.mrb[0].mxu0
        %v304 = vadd.f32 %v247, %v303
        %v305 = vpop.f32.mrb[0].mxu0
        %v306 = vpop.f32.mrb[0].mxu0
        %v307 = vadd.f32 %v247, %v306
        %v308 = vpop.f32.mrb[0].mxu0
        %309 = vdwg.mxu0
        %v310 = vmax.f32 %v296, 0.0
        %v311 = vmax.f32 %v299, 0.0
        %v312 = vmax.f32 %v304, 0.0
        %v313 = vmax.f32 %v307, 0.0
        %v314 = vpack.c.bf16 %v311, %v310
        %v315 = vpack.c.bf16 %v313, %v312
        %v316 = vld [vmem:[#allocation2] sm:$0xf]
        %v317 = vld [vmem:[#allocation2 + $0x4] sm:$0xf]
        %v318 = vld [vmem:[#allocation2 + $0x8] sm:$0xf]
        %v319 = vld [vmem:[#allocation2 + $0xc] sm:$0xf]
        %v320 = vld [vmem:[#allocation2 + $0x10] sm:$0xf]
        %v321 = vld [vmem:[#allocation2 + $0x14] sm:$0xf]
        %v322 = vld [vmem:[#allocation2 + $0x18] sm:$0xf]
        %v323 = vld [vmem:[#allocation2 + $0x1c] sm:$0xf]
        %v324 = vld [vmem:[#allocation2 + $0x20] sm:$0xf]
        %v325 = vld [vmem:[#allocation2 + $0x24] sm:$0xf]
        %v326 = vld [vmem:[#allocation2 + $0x28] sm:$0xf]
        %v327 = vld [vmem:[#allocation2 + $0x2c] sm:$0xf]
        %v328 = vld [vmem:[#allocation2 + $0x30] sm:$0xf]
        %v329 = vld [vmem:[#allocation2 + $0x34] sm:$0xf]
        %v330 = vld [vmem:[#allocation2 + $0x38] sm:$0xf]
        %v331 = vld [vmem:[#allocation2 + $0x3c] sm:$0xf]
        %v332 = vld [vmem:[%s3 + $0x1] sm:$0x1]
        %v333 = vlaneseq
        %v334 = vshrl.u32 %v333, 7
        %v335 = vsub.s32 0, %v334
        %v336 = vrot.slane %v332, %v335
        %v353 = vunpack.c.l.b16 %v316
        %v354 = vunpack.c.l.b16 %v317
        %v355 = vunpack.c.l.b16 %v318
        %v356 = vunpack.c.l.b16 %v319
        %v357 = vunpack.c.l.b16 %v320
        %v358 = vunpack.c.l.b16 %v321
        %v359 = vunpack.c.l.b16 %v322
        %v360 = vunpack.c.l.b16 %v323
        %v361 = vunpack.c.l.b16 %v324
        %v362 = vunpack.c.l.b16 %v325
        %v363 = vunpack.c.l.b16 %v326
        %v364 = vunpack.c.l.b16 %v327
        %v365 = vunpack.c.l.b16 %v328
        %v366 = vunpack.c.l.b16 %v329
        %v367 = vunpack.c.l.b16 %v330
        %v368 = vunpack.c.l.b16 %v331
        %v369 = vpack.c.b16 %v354, %v353
        %v370 = vpack.c.b16 %v356, %v355
        %v371 = vpack.c.b16 %v358, %v357
        %v372 = vpack.c.b16 %v360, %v359
        %v373 = vpack.c.b16 %v362, %v361
        %v374 = vpack.c.b16 %v364, %v363
        %v375 = vpack.c.b16 %v366, %v365
        %v376 = vpack.c.b16 %v368, %v367
        %385 = vmatprep.subr.bf16.mxu0 0
        %386 = vmatpush1.bf16.msra.mxu0 %v369
        %387 = vmatprep.subr.bf16.mxu0 0
        %388 = vmatpush1.bf16.msra.mxu0 %v370
        %389 = vmatprep.subr.bf16.mxu0 0
        %390 = vmatpush1.bf16.msra.mxu0 %v371
        %391 = vmatprep.subr.bf16.mxu0 0
        %392 = vmatpush1.bf16.msra.mxu0 %v372
        %393 = vmatprep.subr.bf16.mxu0 0
        %394 = vmatpush1.bf16.msra.mxu0 %v373
        %395 = vmatprep.subr.bf16.mxu0 0
        %396 = vmatpush1.bf16.msra.mxu0 %v374
        %397 = vmatprep.subr.bf16.mxu0 0
        %398 = vmatpush1.bf16.msra.mxu0 %v375
        %399 = vmatprep.subr.bf16.mxu0 0
        %400 = vmatpush1.bf16.msra.mxu0 %v376
        %401 = vmatprep.subr.bf16.mxu0 0
        %402 = vmatpush1.bf16.msra.mxu0 0
        %403 = vmatprep.subr.bf16.mxu0 0
        %404 = vmatpush1.bf16.msra.mxu0 0
        %405 = vmatprep.subr.bf16.mxu0 0
        %406 = vmatpush1.bf16.msra.mxu0 0
        %407 = vmatprep.subr.bf16.mxu0 0
        %408 = vmatpush1.bf16.msra.mxu0 0
        %409 = vmatprep.subr.bf16.mxu0 0
        %410 = vmatpush1.bf16.msra.mxu0 0
        %411 = vmatprep.subr.bf16.mxu0 0
        %412 = vmatpush1.bf16.msra.mxu0 0
        %413 = vmatprep.subr.bf16.mxu0 0
        %414 = vmatpush1.bf16.msra.mxu0 0
        %415 = vmatprep.subr.bf16.mxu0 0
        %416 = vmatpush1.bf16.msra.mxu0 0
        %417 = vmatprep.mubr.bf16.mxu0 0
        %418 = vmatmul.mubr.bf16.gmra.mrb[0].mxu0 %v314
        %v419 = vpop.f32.mrb[0].mxu0
        %v420 = vadd.f32 %v336, %v419
        %v421 = vpop.f32.mrb[0].mxu0
        %v422 = vpop.f32.mrb[0].mxu0
        %v423 = vadd.f32 %v336, %v422
        %v424 = vpop.f32.mrb[0].mxu0
        %425 = vmatprep.mubr.bf16.mxu0 0
        %426 = vmatmul.mubr.bf16.gmra.mrb[0].mxu0 %v315
        %v427 = vpop.f32.mrb[0].mxu0
        %v428 = vadd.f32 %v336, %v427
        %v429 = vpop.f32.mrb[0].mxu0
        %v430 = vpop.f32.mrb[0].mxu0
        %v431 = vadd.f32 %v336, %v430
        %v432 = vpop.f32.mrb[0].mxu0
        %433 = vdwg.mxu0
        %v434 = vmax.f32 %v420, 0.0
        %v435 = vmax.f32 %v423, 0.0
        %v436 = vmax.f32 %v428, 0.0
        %v437 = vmax.f32 %v431, 0.0
        %v438 = vpack.c.bf16 %v435, %v434
        %v439 = vpack.c.bf16 %v437, %v436
        %s440 = scalar_lea.vmem [#allocation2], 64
        %v441 = vld [vmem:[%s440] sm:$0xf]
        %v442 = vld [vmem:[%s440 + $0x4] sm:$0xf]
        %v443 = vld [vmem:[%s440 + $0x8] sm:$0xf]
        %v444 = vld [vmem:[%s440 + $0xc] sm:$0xf]
        %v445 = vld [vmem:[%s440 + $0x10] sm:$0xf]
        %v446 = vld [vmem:[%s440 + $0x14] sm:$0xf]
        %v447 = vld [vmem:[%s440 + $0x18] sm:$0xf]
        %v448 = vld [vmem:[%s440 + $0x1c] sm:$0xf]
        %v449 = vld [vmem:[%s440 + $0x20] sm:$0xf]
        %v450 = vld [vmem:[%s440 + $0x24] sm:$0xf]
        %v451 = vld [vmem:[%s440 + $0x28] sm:$0xf]
        %v452 = vld [vmem:[%s440 + $0x2c] sm:$0xf]
        %v453 = vld [vmem:[%s440 + $0x30] sm:$0xf]
        %v454 = vld [vmem:[%s440 + $0x34] sm:$0xf]
        %v455 = vld [vmem:[%s440 + $0x38] sm:$0xf]
        %v456 = vld [vmem:[%s440 + $0x3c] sm:$0xf]
        %v457 = vld [vmem:[%s3 + $0x2] sm:$0x1]
        %v458 = vlaneseq
        %v459 = vshrl.u32 %v458, 7
        %v460 = vsub.s32 0, %v459
        %v461 = vrot.slane %v457, %v460
        %v478 = vunpack.c.l.b16 %v441
        %v479 = vunpack.c.l.b16 %v442
        %v480 = vunpack.c.l.b16 %v443
        %v481 = vunpack.c.l.b16 %v444
        %v482 = vunpack.c.l.b16 %v445
        %v483 = vunpack.c.l.b16 %v446
        %v484 = vunpack.c.l.b16 %v447
        %v485 = vunpack.c.l.b16 %v448
        %v486 = vunpack.c.l.b16 %v449
        %v487 = vunpack.c.l.b16 %v450
        %v488 = vunpack.c.l.b16 %v451
        %v489 = vunpack.c.l.b16 %v452
        %v490 = vunpack.c.l.b16 %v453
        %v491 = vunpack.c.l.b16 %v454
        %v492 = vunpack.c.l.b16 %v455
        %v493 = vunpack.c.l.b16 %v456
        %v494 = vpack.c.b16 %v479, %v478
        %v495 = vpack.c.b16 %v481, %v480
        %v496 = vpack.c.b16 %v483, %v482
        %v497 = vpack.c.b16 %v485, %v484
        %v498 = vpack.c.b16 %v487, %v486
        %v499 = vpack.c.b16 %v489, %v488
        %v500 = vpack.c.b16 %v491, %v490
        %v501 = vpack.c.b16 %v493, %v492
        %510 = vmatprep.subr.bf16.mxu0 0
        %511 = vmatpush1.bf16.msra.mxu0 %v494
        %512 = vmatprep.subr.bf16.mxu0 0
        %513 = vmatpush1.bf16.msra.mxu0 %v495
        %514 = vmatprep.subr.bf16.mxu0 0
        %515 = vmatpush1.bf16.msra.mxu0 %v496
        %516 = vmatprep.subr.bf16.mxu0 0
        %517 = vmatpush1.bf16.msra.mxu0 %v497
        %518 = vmatprep.subr.bf16.mxu0 0
        %519 = vmatpush1.bf16.msra.mxu0 %v498
        %520 = vmatprep.subr.bf16.mxu0 0
        %521 = vmatpush1.bf16.msra.mxu0 %v499
        %522 = vmatprep.subr.bf16.mxu0 0
        %523 = vmatpush1.bf16.msra.mxu0 %v500
        %524 = vmatprep.subr.bf16.mxu0 0
        %525 = vmatpush1.bf16.msra.mxu0 %v501
        %526 = vmatprep.subr.bf16.mxu0 0
        %527 = vmatpush1.bf16.msra.mxu0 0
        %528 = vmatprep.subr.bf16.mxu0 0
        %529 = vmatpush1.bf16.msra.mxu0 0
        %530 = vmatprep.subr.bf16.mxu0 0
        %531 = vmatpush1.bf16.msra.mxu0 0
        %532 = vmatprep.subr.bf16.mxu0 0
        %533 = vmatpush1.bf16.msra.mxu0 0
        %534 = vmatprep.subr.bf16.mxu0 0
        %535 = vmatpush1.bf16.msra.mxu0 0
        %536 = vmatprep.subr.bf16.mxu0 0
        %537 = vmatpush1.bf16.msra.mxu0 0
        %538 = vmatprep.subr.bf16.mxu0 0
        %539 = vmatpush1.bf16.msra.mxu0 0
        %540 = vmatprep.subr.bf16.mxu0 0
        %541 = vmatpush1.bf16.msra.mxu0 0
        %542 = vmatprep.mubr.bf16.mxu0 0
        %543 = vmatmul.mubr.bf16.gmra.mrb[0].mxu0 %v438
        %v544 = vpop.f32.mrb[0].mxu0
        %v545 = vadd.f32 %v461, %v544
        %v546 = vpop.f32.mrb[0].mxu0
        %v547 = vpop.f32.mrb[0].mxu0
        %v548 = vadd.f32 %v461, %v547
        %v549 = vpop.f32.mrb[0].mxu0
        %550 = vmatprep.mubr.bf16.mxu0 0
        %551 = vmatmul.mubr.bf16.gmra.mrb[0].mxu0 %v439
        %v552 = vpop.f32.mrb[0].mxu0
        %v553 = vadd.f32 %v461, %v552
        %v554 = vpop.f32.mrb[0].mxu0
        %v555 = vpop.f32.mrb[0].mxu0
        %v556 = vadd.f32 %v461, %v555
        %v557 = vpop.f32.mrb[0].mxu0
        %558 = vdwg.mxu0
        %559 = vmax.xlane.f32.xlu0 %v545
        %v560 = vpop.xlane.xlu0 %559
        %561 = vmax.xlane.f32.xlu0 %v548
        %v562 = vpop.xlane.xlu0 %561
        %563 = vmax.xlane.f32.xlu0 %v553
        %v564 = vpop.xlane.xlu0 %563
        %565 = vmax.xlane.f32.xlu0 %v556
        %v566 = vpop.xlane.xlu0 %565
        %v567 = vsub.f32 %v545, %v560
        %v568 = vsub.f32 %v548, %v562
        %v569 = vsub.f32 %v553, %v564
        %v570 = vsub.f32 %v556, %v566
        %v571 = vmul.f32 %v567, 1.442695
        %v572 = vpow.pop %v571
        %v573 = vmul.f32 %v568, 1.442695
        %v574 = vpow.pop %v573
        %v575 = vmul.f32 %v569, 1.442695
        %v576 = vpow.pop %v575
        %v577 = vmul.f32 %v570, 1.442695
        %v578 = vpow.pop %v577
        %579 = vadd.xlane.f32.xlu0 %v572
        %v580 = vpop.xlane.xlu0 %579
        %581 = vadd.xlane.f32.xlu0 %v574
        %v582 = vpop.xlane.xlu0 %581
        %583 = vadd.xlane.f32.xlu0 %v576
        %v584 = vpop.xlane.xlu0 %583
        %585 = vadd.xlane.f32.xlu0 %v578
        %v586 = vpop.xlane.xlu0 %585
        %v587 = vrcp.pop %v580
        %v588 = vmul.f32 %v572, %v587
        %v589 = vrcp.pop %v582
        %v590 = vmul.f32 %v574, %v589
        %v591 = vrcp.pop %v584
        %v592 = vmul.f32 %v576, %v591
        %v593 = vrcp.pop %v586
        %v594 = vmul.f32 %v578, %v593
        %vm595 = vcmask 64512
        %596 = vst.msk [vmem:[%s214] sm:$0xff] %vm595, %v588
        %597 = vst.msk [vmem:[%s214 + $0x8] sm:$0xff] %vm595, %v590
        %598 = vst.msk [vmem:[%s214 + $0x10] sm:$0xff] %vm595, %v592
        %599 = vst.msk [vmem:[%s214 + $0x18] sm:$0xff] %vm595, %v594
        %s600 = sand.u32 %s113, 1
        %s601 = sand.u32 %s113, 1
        %s602 = smul.addr %s601, 32
        %s603 = scalar_lea.vmem [#allocation4], %s602
        // Predicated region
        $region41: #{tpu_custom_call.1} parent=35 // pred_check
          %p604 = pneg %p123
        $region42: #{tpu_custom_call.1} parent=35 // pred_check_branch
          %606 = sbr.rel (%p604) target = $region44
        $region43: #{tpu_custom_call.1} parent=35 // pred_region
          %s607 = smul.u32 4, %s16
          %s608 = ssub.s32 7, %s607
          %p609 = scmp.lt.s32.totalorder %s608, 4
          %s610 = scalar_select %p609, %s608, 4
          %s611 = smul.u32 128, %s610
          %p612 = scmp.ne.s32.totalorder 0, %s611
          %s613 = smul.addr %s607, 8
          %s614 = scalar_lea.vmem %s4, %s613
          // Predicated region
          $region45: #{tpu_custom_call.1} parent=43 // pred_check
            %p615 = pneg %p612
          $region46: #{tpu_custom_call.1} parent=43 // pred_check_branch
            %617 = sbr.rel (%p615) target = $region48
          $region47: #{tpu_custom_call.1} parent=43 // pred_region
            // Predicated region
            $region49: #{tpu_custom_call.1} parent=47 // pred_check
              _
            $region50: #{tpu_custom_call.1} parent=47 // pred_check_branch
              %619 = sbr.rel (0) target = $region52
            $region51: #{tpu_custom_call.1} parent=47 // pred_region
              // Predicated region
              $region71: #{tpu_custom_call.1} parent=51 // pred_check
                _
              $region72: #{tpu_custom_call.1} parent=51 // pred_check_branch
                %674 = sbr.rel (0) target = $region74
              $region73: #{tpu_custom_call.1} parent=51 // pred_region
                %s675 = sshrl.u32 %s610, 2
                // While loop
                $region75: #{tpu_custom_call.1} parent=73 // loop_pre_header
                  _
                $region76: #{tpu_custom_call.1} parent=73 // loop_header
                  %s677 = sphi 0, %s679
                  %p678 = scmp.ge.s32.totalorder %s677, %s675
                  %s682 = sphi 0, %s695
                  %s683 = sphi %s603, %s698
                  %s684 = sphi %s614, %s699
                $region77: #{tpu_custom_call.1} parent=73 // loop_header_branch
                  %681 = sbr.rel (%p678) target = $region81
                $region78: #{tpu_custom_call.1} parent=73 // loop_body
                  %v685 = vld [vmem:[%s683] sm:$0xff]
                  %686 = vst [vmem:[%s684] sm:$0xff] %v685
                  %v687 = vld [vmem:[%s683 + $0x8] sm:$0xff]
                  %688 = vst [vmem:[%s684 + $0x8] sm:$0xff] %v687
                  %v689 = vld [vmem:[%s683 + $0x10] sm:$0xff]
                  %690 = vst [vmem:[%s684 + $0x10] sm:$0xff] %v689
                  %v691 = vld [vmem:[%s683 + $0x18] sm:$0xff]
                  %692 = vst [vmem:[%s684 + $0x18] sm:$0xff] %v691
                  %s693 = sadd.s32 1, %s682
                  %p694 = scmp.ge.s32.totalorder %s693, %s675
                  %s695 = scalar_select %p694, 0, %s693
                  %s696 = smul.u32 %s695, 32
                  %s697 = smul.u32 %s695, 32
                  %s698 = scalar_lea.vmem %s603, %s696 [#allocation4]
                  %s699 = scalar_lea.vmem %s614, %s697
                $region79: #{tpu_custom_call.1} parent=73 // loop_footer
                  %s679 = sadd.s32 %s677, 1
                $region80: #{tpu_custom_call.1} parent=73 // loop_footer_branch
                  %676 = sbr.rel target = $region76
                $region81: #{tpu_custom_call.1} parent=73 // loop_exit
                  _
                %s700 = sshrl.u32 %s610, 2
                %s701 = sand.u32 %s610, 3
                %s702 = smul.u32 %s700, 4
                %s703 = smul.u32 8, %s702
                %s704 = scalar_lea.vmem %s603, %s703 [#allocation4]
                %s705 = smul.u32 8, %s702
                %s706 = scalar_lea.vmem %s614, %s705
                // While loop
                $region82: #{tpu_custom_call.1} parent=73 // loop_pre_header
                  _
                $region83: #{tpu_custom_call.1} parent=73 // loop_header
                  %s708 = sphi 0, %s710
                  %p709 = scmp.ge.s32.totalorder %s708, %s701
                  %s713 = sphi 0, %s720
                  %s714 = sphi %s704, %s723
                  %s715 = sphi %s706, %s724
                $region84: #{tpu_custom_call.1} parent=73 // loop_header_branch
                  %712 = sbr.rel (%p709) target = $region88
                $region85: #{tpu_custom_call.1} parent=73 // loop_body
                  %v716 = vld [vmem:[%s714] sm:$0xff]
                  %717 = vst [vmem:[%s715] sm:$0xff] %v716
                  %s718 = sadd.s32 1, %s713
                  %p719 = scmp.ge.s32.totalorder %s718, %s701
                  %s720 = scalar_select %p719, 0, %s718
                  %s721 = smul.u32 %s720, 8
                  %s722 = smul.u32 %s720, 8
                  %s723 = scalar_lea.vmem %s704, %s721 [#allocation4]
                  %s724 = scalar_lea.vmem %s706, %s722
                $region86: #{tpu_custom_call.1} parent=73 // loop_footer
                  %s710 = sadd.s32 %s708, 1
                $region87: #{tpu_custom_call.1} parent=73 // loop_footer_branch
                  %707 = sbr.rel target = $region83
                $region88: #{tpu_custom_call.1} parent=73 // loop_exit
                  _
              $region74: #{tpu_custom_call.1} parent=51 // pred_fallthru
                _
              // Predicated region
              $region89: #{tpu_custom_call.1} parent=51 // pred_check
                _
              $region90: #{tpu_custom_call.1} parent=51 // pred_check_branch
                %726 = sbr.rel target = $region92
              $region91: #{tpu_custom_call.1} parent=51 // pred_region
                _
              $region92: #{tpu_custom_call.1} parent=51 // pred_fallthru
                _
            $region52: #{tpu_custom_call.1} parent=47 // pred_fallthru
              _
            // Predicated region
            $region53: #{tpu_custom_call.1} parent=47 // pred_check
              _
            $region54: #{tpu_custom_call.1} parent=47 // pred_check_branch
              %621 = sbr.rel target = $region56
            $region55: #{tpu_custom_call.1} parent=47 // pred_region
              %s623 = sshrl.u32 %s610, 2
              // While loop
              $region57: #{tpu_custom_call.1} parent=55 // loop_pre_header
                _
              $region58: #{tpu_custom_call.1} parent=55 // loop_header
                %s625 = sphi 0, %s627
                %p626 = scmp.ge.s32.totalorder %s625, %s623
                %s630 = sphi 0, %s643
                %s631 = sphi %s603, %s646
                %s632 = sphi %s614, %s647
              $region59: #{tpu_custom_call.1} parent=55 // loop_header_branch
                %629 = sbr.rel (%p626) target = $region63
              $region60: #{tpu_custom_call.1} parent=55 // loop_body
                %v633 = vld [vmem:[%s631] sm:$0xff]
                %634 = vst [vmem:[%s632] sm:$0xff] %v633
                %v635 = vld [vmem:[%s631 + $0x8] sm:$0xff]
                %636 = vst [vmem:[%s632 + $0x8] sm:$0xff] %v635
                %v637 = vld [vmem:[%s631 + $0x10] sm:$0xff]
                %638 = vst [vmem:[%s632 + $0x10] sm:$0xff] %v637
                %v639 = vld [vmem:[%s631 + $0x18] sm:$0xff]
                %640 = vst [vmem:[%s632 + $0x18] sm:$0xff] %v639
                %s641 = sadd.s32 1, %s630
                %p642 = scmp.ge.s32.totalorder %s641, %s623
                %s643 = scalar_select %p642, 0, %s641
                %s644 = smul.u32 %s643, 32
                %s645 = smul.u32 %s643, 32
                %s646 = scalar_lea.vmem %s603, %s644 [#allocation4]
                %s647 = scalar_lea.vmem %s614, %s645
              $region61: #{tpu_custom_call.1} parent=55 // loop_footer
                %s627 = sadd.s32 %s625, 1
              $region62: #{tpu_custom_call.1} parent=55 // loop_footer_branch
                %624 = sbr.rel target = $region58
              $region63: #{tpu_custom_call.1} parent=55 // loop_exit
                _
              %s648 = sshrl.u32 %s610, 2
              %s649 = sand.u32 %s610, 3
              %s650 = smul.u32 %s648, 4
              %s651 = smul.u32 8, %s650
              %s652 = scalar_lea.vmem %s603, %s651 [#allocation4]
              %s653 = smul.u32 8, %s650
              %s654 = scalar_lea.vmem %s614, %s653
              // While loop
              $region64: #{tpu_custom_call.1} parent=55 // loop_pre_header
                _
              $region65: #{tpu_custom_call.1} parent=55 // loop_header
                %s656 = sphi 0, %s658
                %p657 = scmp.ge.s32.totalorder %s656, %s649
                %s661 = sphi 0, %s668
                %s662 = sphi %s652, %s671
                %s663 = sphi %s654, %s672
              $region66: #{tpu_custom_call.1} parent=55 // loop_header_branch
                %660 = sbr.rel (%p657) target = $region70
              $region67: #{tpu_custom_call.1} parent=55 // loop_body
                %v664 = vld [vmem:[%s662] sm:$0xff]
                %665 = vst [vmem:[%s663] sm:$0xff] %v664
                %s666 = sadd.s32 1, %s661
                %p667 = scmp.ge.s32.totalorder %s666, %s649
                %s668 = scalar_select %p667, 0, %s666
                %s669 = smul.u32 %s668, 8
                %s670 = smul.u32 %s668, 8
                %s671 = scalar_lea.vmem %s652, %s669 [#allocation4]
                %s672 = scalar_lea.vmem %s654, %s670
              $region68: #{tpu_custom_call.1} parent=55 // loop_footer
                %s658 = sadd.s32 %s656, 1
              $region69: #{tpu_custom_call.1} parent=55 // loop_footer_branch
                %655 = sbr.rel target = $region65
              $region70: #{tpu_custom_call.1} parent=55 // loop_exit
                _
            $region56: #{tpu_custom_call.1} parent=47 // pred_fallthru
              _
          $region48: #{tpu_custom_call.1} parent=43 // pred_fallthru
            _
          %727 = vnop
        $region44: #{tpu_custom_call.1} parent=35 // pred_fallthru
          _
      $region36: #{tpu_custom_call.1} parent=5 // pred_fallthru
        _
      %p728 = scmp.le.s32.totalorder 2, %s11
      // Predicated region
      $region93: #{tpu_custom_call.1} parent=5 // pred_check
        %p729 = pneg %p728
      $region94: #{tpu_custom_call.1} parent=5 // pred_check_branch
        %731 = sbr.rel (%p729) target = $region96
      $region95: #{tpu_custom_call.1} parent=5 // pred_region
        %s732 = ssub.s32 %s11, 2
        // Predicated region
        $region97: #{tpu_custom_call.1} parent=95 // pred_check
          %p733 = pneg %p129
        $region98: #{tpu_custom_call.1} parent=95 // pred_check_branch
          %735 = sbr.rel (%p733) target = $region100
        $region99: #{tpu_custom_call.1} parent=95 // pred_region
          %s736 = sand.u32 %s114, 1
          %s737 = sand.u32 %s114, 1
          %s738 = smul.addr %s737, 32
          %s739 = scalar_lea.vmem [#allocation4], %s738
        $region100: #{tpu_custom_call.1} parent=95 // pred_fallthru
          _
      $region96: #{tpu_custom_call.1} parent=5 // pred_fallthru
        _
    $region6: #{tpu_custom_call.1} parent=1 // loop_footer
      %s15 = sadd.s32 1, %s11
    $region7: #{tpu_custom_call.1} parent=1 // loop_footer_branch
      %10 = sbr.rel target = $region3
    $region8: #{tpu_custom_call.1} parent=1 // loop_exit
      _
    %740 = vsyncpa [#allocation3], 1
    %s741 = scalar_lea.sflag [#allocation3], 1
    %742 = vsyncpa %s741, 1

</llo_original>
